<compile_context>
chip_gen: v7x
topology: tpu7x:2x2x1
jax: 0.10.0
libtpu: 0.0.40
codegen_flags: <defaults>
</compile_context>

<pallas_src>
import jax
import jax.numpy as jnp
from jax.experimental import pallas as pl
from jax.experimental.pallas import tpu as pltpu


# ---------------- model hyper-params (small, consistent with the module) ------------
B            = 8      # batch
OBS_DIM      = 32
HIDDEN_DIM   = 32
HIDDEN_DEPTH = 2      # trunk: Linear -> ReLU -> Linear -> ReLU -> Linear
ACTION_DIM   = 4
DET_OUT_DIM  = 8      # det_module output dim (>= action_dim, sliced to action_dim)
LOG_STD_MIN  = -5.0
LOG_STD_MAX  = 2.0

PACK_W = 64           # lane width of the packed parameter slab
PACK_R = 152          # rows: 3 weight blocks (32+64+32) + 3 bias rows at 8-aligned offsets


def actor_kernel(obs_ref, p_ref, out_ref):
    x = obs_ref[...]                                                     # [B, 32]

    # ---- fused layer 1: [trunk L0 | det L0] --------------------------------------
    y1 = jnp.dot(x, p_ref[0:32, :], preferred_element_type=jnp.float32)  # [B, 64]
    y1 = jnp.maximum(y1 + p_ref[128:129, :], 0.0)                        # ReLU (both branches)

    # ---- fused layer 2: block-diag [trunk L1 | det out(sliced)] -------------------
    y2 = jnp.dot(y1, p_ref[32:96, :], preferred_element_type=jnp.float32)
    y2 = y2 + p_ref[136:137, :]                                          # [B, 64]
    h2 = jnp.maximum(y2[:, 0:HIDDEN_DIM], 0.0)                           # trunk hidden, ReLU
    mu = y2[:, HIDDEN_DIM:HIDDEN_DIM + ACTION_DIM]                       # det output, NO ReLU

    # ---- trunk output layer -> log_std --------------------------------------------
    ls = jnp.dot(h2, p_ref[96:128, :], preferred_element_type=jnp.float32)
    ls = ls + p_ref[144:145, :]                                          # [B, 64], cols 0:4 valid
    log_std = ls[:, 0:ACTION_DIM]

    # ---- squash / rescale log_std, std = exp(log_std) -----------------------------
    log_std = jnp.tanh(log_std)
    log_std = LOG_STD_MIN + 0.5 * (LOG_STD_MAX - LOG_STD_MIN) * (log_std + 1.0)
    std = jnp.exp(log_std)

    # ---- single lane-packed output [mu | std | tanh(mu)] ---------------------------
    out_ref[...] = jnp.concatenate([mu, std, jnp.tanh(mu)], axis=-1)


def pack_params(params):
    """Pack the 10 parameter arrays into one (152, 64) f32 slab (trace-time)."""
    w0, b0, w1, b1, w2, b2, wd0, bd0, wd1, bd1 = params
    wd1s = wd1[:, :ACTION_DIM]          # pre-slice det output layer to action_dim
    bd1s = bd1[:, :ACTION_DIM]

    slab = jnp.zeros((PACK_R, PACK_W), jnp.float32)
    # fused layer-1 weight [32, 64] = [w0 | wd0]
    slab = slab.at[0:32, 0:32].set(w0)
    slab = slab.at[0:32, 32:64].set(wd0)
    # fused layer-2 weight [64, 64], block diagonal
    slab = slab.at[32:64, 0:32].set(w1)                 # trunk hidden layer
    slab = slab.at[64:96, 32:32 + ACTION_DIM].set(wd1s) # det output layer (sliced)
    # trunk output weight [32, 64], only cols 0:ACTION_DIM used
    slab = slab.at[96:128, 0:ACTION_DIM].set(w2)
    # biases (one 8-aligned row each)
    slab = slab.at[128:129, 0:32].set(b0)
    slab = slab.at[128:129, 32:64].set(bd0)
    slab = slab.at[136:137, 0:32].set(b1)
    slab = slab.at[136:137, 32:32 + ACTION_DIM].set(bd1s)
    slab = slab.at[144:145, 0:ACTION_DIM].set(b2)
    return slab


@jax.jit
def stochastic_actor_forward(obs, params):
    slab = pack_params(params)   # in practice, precompute once per weight update
    vmem = pl.BlockSpec(memory_space=pltpu.MemorySpace.VMEM)
    packed = pl.pallas_call(
        actor_kernel,
        out_shape=jax.ShapeDtypeStruct((B, 3 * ACTION_DIM), jnp.float32),
        in_specs=[vmem, vmem],
        out_specs=vmem,
    )(obs, slab)
    mu = packed[:, 0:ACTION_DIM]
    std = packed[:, ACTION_DIM:2 * ACTION_DIM]
    mean = packed[:, 2 * ACTION_DIM:3 * ACTION_DIM]
    return mu, std, mean


def init_params(key):
    """Deterministic synthetic weights (shapes match the PyTorch module __init__)."""
    ks = jax.random.split(key, 10)

    def lin(k, fan_in, fan_out):
        w = jax.random.normal(k, (fan_in, fan_out), jnp.float32) / jnp.sqrt(fan_in)
        b = jnp.zeros((1, fan_out), jnp.float32)
        return w, b

    w0, b0 = lin(ks[0], OBS_DIM, HIDDEN_DIM)        # trunk layer 0
    w1, b1 = lin(ks[1], HIDDEN_DIM, HIDDEN_DIM)     # trunk layer 1
    w2, b2 = lin(ks[2], HIDDEN_DIM, ACTION_DIM)     # trunk output
    wd0, bd0 = lin(ks[3], OBS_DIM, HIDDEN_DIM)      # det_module layer 0
    wd1, bd1 = lin(ks[4], HIDDEN_DIM, DET_OUT_DIM)  # det_module output
    return (w0, b0, w1, b1, w2, b2, wd0, bd0, wd1, bd1)


def reference_forward(obs, params):
    w0, b0, w1, b1, w2, b2, wd0, bd0, wd1, bd1 = params
    h = jnp.maximum(obs @ w0 + b0, 0.0)
    h = jnp.maximum(h @ w1 + b1, 0.0)
    log_std = h @ w2 + b2
    d = jnp.maximum(obs @ wd0 + bd0, 0.0)
    mu = (d @ wd1 + bd1)[:, :ACTION_DIM]
    log_std = jnp.tanh(log_std)
    log_std = LOG_STD_MIN + 0.5 * (LOG_STD_MAX - LOG_STD_MIN) * (log_std + 1.0)
    std = jnp.exp(log_std)
    return mu, std, jnp.tanh(mu)


if __name__ == "__main__":
    key = jax.random.PRNGKey(0)
    k_obs, k_par = jax.random.split(key)
    obs = jax.random.normal(k_obs, (B, OBS_DIM), jnp.float32)
    params = init_params(k_par)

    mu, std, mean = stochastic_actor_forward(obs, params)
    jax.block_until_ready((mu, std, mean))

    mu_r, std_r, mean_r = reference_forward(obs, params)
    assert jnp.allclose(mu, mu_r, atol=1e-5, rtol=1e-5)
    assert jnp.allclose(std, std_r, atol=1e-5, rtol=1e-5)
    assert jnp.allclose(mean, mean_r, atol=1e-5, rtol=1e-5)

    print("KERNEL_OK")
</pallas_src>

<mosaic_0001>
module attributes {stable_mosaic.version = 11 : i64} {
  func.func @actor_kernel(%arg0: memref<8x32xf32, #tpu.memory_space<vmem>>, %arg1: memref<152x64xf32, #tpu.memory_space<vmem>>, %arg2: memref<8x12xf32, #tpu.memory_space<vmem>>) attributes {dimension_semantics = [], scalar_prefetch = 0 : i64, scratch_operands = 0 : i64, tpu.core_type = #tpu.core_type<tc>} {
    %c0 = arith.constant 0 : index
    %c0_0 = arith.constant 0 : index
    %0 = vector.load %arg0[%c0, %c0_0] : memref<8x32xf32, #tpu.memory_space<vmem>>, vector<8x32xf32>
    %c0_1 = arith.constant 0 : index
    %c0_2 = arith.constant 0 : index
    %1 = vector.load %arg1[%c0_1, %c0_2] : memref<152x64xf32, #tpu.memory_space<vmem>>, vector<32x64xf32>
    %cst = arith.constant dense<0.000000e+00> : vector<8x64xf32>
    %2 = tpu.matmul %0, %1, %cst {dimension_numbers = #tpu.dot_dimension_numbers<[1], [0], [0], [1], [0, 0, 1, 1], [], []>} : vector<8x32xf32>, vector<32x64xf32>, vector<8x64xf32> -> vector<8x64xf32>
    %c128 = arith.constant 128 : index
    %c0_3 = arith.constant 0 : index
    %3 = vector.load %arg1[%c128, %c0_3] : memref<152x64xf32, #tpu.memory_space<vmem>>, vector<1x64xf32>
    %4 = vector.broadcast %3 : vector<1x64xf32> to vector<8x64xf32>
    %5 = arith.addf %2, %4 : vector<8x64xf32>
    %cst_4 = arith.constant 0.000000e+00 : f32
    %6 = vector.broadcast %cst_4 : f32 to vector<8x64xf32>
    %7 = arith.maximumf %5, %6 : vector<8x64xf32>
    %c32 = arith.constant 32 : index
    %c0_5 = arith.constant 0 : index
    %8 = vector.load %arg1[%c32, %c0_5] : memref<152x64xf32, #tpu.memory_space<vmem>>, vector<64x64xf32>
    %cst_6 = arith.constant dense<0.000000e+00> : vector<8x64xf32>
    %9 = tpu.matmul %7, %8, %cst_6 {dimension_numbers = #tpu.dot_dimension_numbers<[1], [0], [0], [1], [0, 0, 1, 1], [], []>} : vector<8x64xf32>, vector<64x64xf32>, vector<8x64xf32> -> vector<8x64xf32>
    %c136 = arith.constant 136 : index
    %c0_7 = arith.constant 0 : index
    %10 = vector.load %arg1[%c136, %c0_7] : memref<152x64xf32, #tpu.memory_space<vmem>>, vector<1x64xf32>
    %11 = vector.broadcast %10 : vector<1x64xf32> to vector<8x64xf32>
    %12 = arith.addf %9, %11 : vector<8x64xf32>
    %13 = vector.extract_strided_slice %12 {offsets = [0, 0], sizes = [8, 32], strides = [1, 1]} : vector<8x64xf32> to vector<8x32xf32>
    %cst_8 = arith.constant 0.000000e+00 : f32
    %14 = vector.broadcast %cst_8 : f32 to vector<8x32xf32>
    %15 = arith.maximumf %13, %14 : vector<8x32xf32>
    %16 = vector.extract_strided_slice %12 {offsets = [0, 32], sizes = [8, 4], strides = [1, 1]} : vector<8x64xf32> to vector<8x4xf32>
    %c96 = arith.constant 96 : index
    %c0_9 = arith.constant 0 : index
    %17 = vector.load %arg1[%c96, %c0_9] : memref<152x64xf32, #tpu.memory_space<vmem>>, vector<32x64xf32>
    %cst_10 = arith.constant dense<0.000000e+00> : vector<8x64xf32>
    %18 = tpu.matmul %15, %17, %cst_10 {dimension_numbers = #tpu.dot_dimension_numbers<[1], [0], [0], [1], [0, 0, 1, 1], [], []>} : vector<8x32xf32>, vector<32x64xf32>, vector<8x64xf32> -> vector<8x64xf32>
    %c144 = arith.constant 144 : index
    %c0_11 = arith.constant 0 : index
    %19 = vector.load %arg1[%c144, %c0_11] : memref<152x64xf32, #tpu.memory_space<vmem>>, vector<1x64xf32>
    %20 = vector.broadcast %19 : vector<1x64xf32> to vector<8x64xf32>
    %21 = arith.addf %18, %20 : vector<8x64xf32>
    %22 = vector.extract_strided_slice %21 {offsets = [0, 0], sizes = [8, 4], strides = [1, 1]} : vector<8x64xf32> to vector<8x4xf32>
    %23 = math.tanh %22 : vector<8x4xf32>
    %cst_12 = arith.constant 1.000000e+00 : f32
    %24 = vector.broadcast %cst_12 : f32 to vector<8x4xf32>
    %25 = arith.addf %23, %24 : vector<8x4xf32>
    %cst_13 = arith.constant 3.500000e+00 : f32
    %26 = vector.broadcast %cst_13 : f32 to vector<8x4xf32>
    %27 = arith.mulf %26, %25 : vector<8x4xf32>
    %cst_14 = arith.constant -5.000000e+00 : f32
    %28 = vector.broadcast %cst_14 : f32 to vector<8x4xf32>
    %29 = arith.addf %28, %27 : vector<8x4xf32>
    %30 = math.exp %29 : vector<8x4xf32>
    %31 = math.tanh %16 : vector<8x4xf32>
    %32 = tpu.concatenate %16, %30, %31 in 1 : vector<8x4xf32>, vector<8x4xf32>, vector<8x4xf32> -> vector<8x12xf32>
    %c0_15 = arith.constant 0 : index
    %c0_16 = arith.constant 0 : index
    %33 = vector.load %arg2[%c0_15, %c0_16] : memref<8x12xf32, #tpu.memory_space<vmem>>, vector<8x12xf32>
    tpu.vector_store %arg2[%c0_15, %c0_16], %32 {strides = array<i32>} : memref<8x12xf32, #tpu.memory_space<vmem>>, vector<8x12xf32>,
    return
  }
}

</mosaic_0001>

<llo_original>
// kernel: stochastic_actor_forward.1
$region0: #{stochastic_actor_forward.1}
  #allocation0 [shape = 'u32[]', space=smem, size = 0x4, offset = 0x4, fixed_abs, tag = 'smem constant byte address 0x4 - core index']
  #allocation1 [shape = 'u32[144,128]{1,0:T(1,128)}', space=vmem, size = 0x12000, scoped, tag = 'internal scratch']
  %s0 = inlined_call_operand.vmem [shape: f32[8,32], index: 0, kind: input, shape index: {}]
  %s1 = inlined_call_operand.vmem [shape: f32[152,64], index: 1, kind: input, shape index: {}]
  %s2 = inlined_call_operand.vmem [shape: f32[8,12], index: 2, kind: output, shape index: {}]
  %s3 = sld [smem:[#allocation0]]
  $region18: #{stochastic_actor_forward.1} parent=0
    _
  %s5 = ssub.s32 1, %s3
  %s6 = scalar_select 0, %s5, %s3
  // Predicated region
  $region2: #{stochastic_actor_forward.1} parent=0 // pred_check
    _
  $region3: #{stochastic_actor_forward.1} parent=0 // pred_check_branch
    %8 = sbr.rel (0) target = $region5
  $region4: #{stochastic_actor_forward.1} parent=0 // pred_region
    _
  $region5: #{stochastic_actor_forward.1} parent=0 // pred_fallthru
    _
  // Predicated region
  $region6: #{stochastic_actor_forward.1} parent=0 // pred_check
    _
  $region7: #{stochastic_actor_forward.1} parent=0 // pred_check_branch
    %10 = sbr.rel (0) target = $region9
  $region8: #{stochastic_actor_forward.1} parent=0 // pred_region
    _
  $region9: #{stochastic_actor_forward.1} parent=0 // pred_fallthru
    _
  %v11 = vld [vmem:[%s0] sm:$0xff]
  %v12 = vld [vmem:[%s1] sm:$0xff]
  %v13 = vld [vmem:[%s1 + $0x8] sm:$0xff]
  %v14 = vld [vmem:[%s1 + $0x10] sm:$0xff]
  %v15 = vld [vmem:[%s1 + $0x18] sm:$0xff]
  %v16 = vld [vmem:[%s1 + $0x80] sm:$0x1]
  %v17 = vlaneseq
  %v18 = vshrl.u32 %v17, 7
  %v19 = vsub.s32 0, %v18
  %v20 = vrot.slane %v16, %v19
  %vm21 = vcmask 261120
  %v23 = vsel %vm21, %v11, 0
  %25 = vmatprep.subr.mxu0 0.0
  %26 = vmatpush1.msra.mxu0 %v12
  %27 = vmatprep.subr.mxu0 0.0
  %28 = vmatpush1.msra.mxu0 %v13
  %29 = vmatprep.subr.mxu0 0.0
  %30 = vmatpush1.msra.mxu0 %v14
  %31 = vmatprep.subr.mxu0 0.0
  %32 = vmatpush1.msra.mxu0 %v15
  %33 = vmatprep.subr.mxu0 0.0
  %34 = vmatpush1.msra.mxu0 0.0
  %35 = vmatprep.subr.mxu0 0.0
  %36 = vmatpush1.msra.mxu0 0.0
  %37 = vmatprep.subr.mxu0 0.0
  %38 = vmatpush1.msra.mxu0 0.0
  %39 = vmatprep.subr.mxu0 0.0
  %40 = vmatpush1.msra.mxu0 0.0
  %41 = vmatprep.subr.mxu0 0.0
  %42 = vmatpush1.msra.mxu0 0.0
  %43 = vmatprep.subr.mxu0 0.0
  %44 = vmatpush1.msra.mxu0 0.0
  %45 = vmatprep.subr.mxu0 0.0
  %46 = vmatpush1.msra.mxu0 0.0
  %47 = vmatprep.subr.mxu0 0.0
  %48 = vmatpush1.msra.mxu0 0.0
  %49 = vmatprep.subr.mxu0 0.0
  %50 = vmatpush1.msra.mxu0 0.0
  %51 = vmatprep.subr.mxu0 0.0
  %52 = vmatpush1.msra.mxu0 0.0
  %53 = vmatprep.subr.mxu0 0.0
  %54 = vmatpush1.msra.mxu0 0.0
  %55 = vmatprep.subr.mxu0 0.0
  %56 = vmatpush1.msra.mxu0 0.0
  %57 = vmatprep.subr.mxu0 0.0
  %58 = vmatpush1.msra.mxu0 0.0
  %59 = vmatprep.subr.mxu0 0.0
  %60 = vmatpush1.msra.mxu0 0.0
  %61 = vmatprep.subr.mxu0 0.0
  %62 = vmatpush1.msra.mxu0 0.0
  %63 = vmatprep.subr.mxu0 0.0
  %64 = vmatpush1.msra.mxu0 0.0
  %65 = vmatprep.subr.mxu0 0.0
  %66 = vmatpush1.msra.mxu0 0.0
  %67 = vmatprep.subr.mxu0 0.0
  %68 = vmatpush1.msra.mxu0 0.0
  %69 = vmatprep.subr.mxu0 0.0
  %70 = vmatpush1.msra.mxu0 0.0
  %71 = vmatprep.subr.mxu0 0.0
  %72 = vmatpush1.msra.mxu0 0.0
  %73 = vmatprep.subr.mxu0 0.0
  %74 = vmatpush1.msra.mxu0 0.0
  %75 = vmatprep.subr.mxu0 0.0
  %76 = vmatpush1.msra.mxu0 0.0
  %77 = vmatprep.subr.mxu0 0.0
  %78 = vmatpush1.msra.mxu0 0.0
  %79 = vmatprep.subr.mxu0 0.0
  %80 = vmatpush1.msra.mxu0 0.0
  %81 = vmatprep.subr.mxu0 0.0
  %82 = vmatpush1.msra.mxu0 0.0
  %83 = vmatprep.subr.mxu0 0.0
  %84 = vmatpush1.msra.mxu0 0.0
  %85 = vmatprep.subr.mxu0 0.0
  %86 = vmatpush1.msra.mxu0 0.0
  %87 = vmatprep.subr.mxu0 0.0
  %88 = vmatpush1.msra.mxu0 0.0
  %89 = vmatprep.mubr.f32.mxu0 0.0
  %90 = vmatmul.mubr.f32.gmra.mrb[0].mxu0 %v23
  %v91 = vpop.f32.mrb[0].mxu0
  %v92 = vadd.f32 %v20, %v91
  %v93 = vpop.f32.mrb[0].mxu0
  %94 = vdwg.mxu0
  %v95 = vmax.f32 %v92, 0.0
  %v96 = vld [vmem:[%s1 + $0x20] sm:$0xff]
  %v97 = vld [vmem:[%s1 + $0x28] sm:$0xff]
  %v98 = vld [vmem:[%s1 + $0x30] sm:$0xff]
  %v99 = vld [vmem:[%s1 + $0x38] sm:$0xff]
  %v100 = vld [vmem:[%s1 + $0x40] sm:$0xff]
  %v101 = vld [vmem:[%s1 + $0x48] sm:$0xff]
  %v102 = vld [vmem:[%s1 + $0x50] sm:$0xff]
  %v103 = vld [vmem:[%s1 + $0x58] sm:$0xff]
  %v104 = vld [vmem:[%s1 + $0x88] sm:$0x1]
  %v105 = vlaneseq
  %v106 = vshrl.u32 %v105, 7
  %v107 = vsub.s32 0, %v106
  %v108 = vrot.slane %v104, %v107
  %vm109 = vcmask 523264
  %v111 = vsel %vm109, %v95, 0
  %113 = vmatprep.subr.mxu0 0.0
  %114 = vmatpush1.msra.mxu0 %v96
  %115 = vmatprep.subr.mxu0 0.0
  %116 = vmatpush1.msra.mxu0 %v97
  %117 = vmatprep.subr.mxu0 0.0
  %118 = vmatpush1.msra.mxu0 %v98
  %119 = vmatprep.subr.mxu0 0.0
  %120 = vmatpush1.msra.mxu0 %v99
  %121 = vmatprep.subr.mxu0 0.0
  %122 = vmatpush1.msra.mxu0 %v100
  %123 = vmatprep.subr.mxu0 0.0
  %124 = vmatpush1.msra.mxu0 %v101
  %125 = vmatprep.subr.mxu0 0.0
  %126 = vmatpush1.msra.mxu0 %v102
  %127 = vmatprep.subr.mxu0 0.0
  %128 = vmatpush1.msra.mxu0 %v103
  %129 = vmatprep.subr.mxu0 0.0
  %130 = vmatpush1.msra.mxu0 0.0
  %131 = vmatprep.subr.mxu0 0.0
  %132 = vmatpush1.msra.mxu0 0.0
  %133 = vmatprep.subr.mxu0 0.0
  %134 = vmatpush1.msra.mxu0 0.0
  %135 = vmatprep.subr.mxu0 0.0
  %136 = vmatpush1.msra.mxu0 0.0
  %137 = vmatprep.subr.mxu0 0.0
  %138 = vmatpush1.msra.mxu0 0.0
  %139 = vmatprep.subr.mxu0 0.0
  %140 = vmatpush1.msra.mxu0 0.0
  %141 = vmatprep.subr.mxu0 0.0
  %142 = vmatpush1.msra.mxu0 0.0
  %143 = vmatprep.subr.mxu0 0.0
  %144 = vmatpush1.msra.mxu0 0.0
  %145 = vmatprep.subr.mxu0 0.0
  %146 = vmatpush1.msra.mxu0 0.0
  %147 = vmatprep.subr.mxu0 0.0
  %148 = vmatpush1.msra.mxu0 0.0
  %149 = vmatprep.subr.mxu0 0.0
  %150 = vmatpush1.msra.mxu0 0.0
  %151 = vmatprep.subr.mxu0 0.0
  %152 = vmatpush1.msra.mxu0 0.0
  %153 = vmatprep.subr.mxu0 0.0
  %154 = vmatpush1.msra.mxu0 0.0
  %155 = vmatprep.subr.mxu0 0.0
  %156 = vmatpush1.msra.mxu0 0.0
  %157 = vmatprep.subr.mxu0 0.0
  %158 = vmatpush1.msra.mxu0 0.0
  %159 = vmatprep.subr.mxu0 0.0
  %160 = vmatpush1.msra.mxu0 0.0
  %161 = vmatprep.subr.mxu0 0.0
  %162 = vmatpush1.msra.mxu0 0.0
  %163 = vmatprep.subr.mxu0 0.0
  %164 = vmatpush1.msra.mxu0 0.0
  %165 = vmatprep.subr.mxu0 0.0
  %166 = vmatpush1.msra.mxu0 0.0
  %167 = vmatprep.subr.mxu0 0.0
  %168 = vmatpush1.msra.mxu0 0.0
  %169 = vmatprep.subr.mxu0 0.0
  %170 = vmatpush1.msra.mxu0 0.0
  %171 = vmatprep.subr.mxu0 0.0
  %172 = vmatpush1.msra.mxu0 0.0
  %173 = vmatprep.subr.mxu0 0.0
  %174 = vmatpush1.msra.mxu0 0.0
  %175 = vmatprep.subr.mxu0 0.0
  %176 = vmatpush1.msra.mxu0 0.0
  %177 = vmatprep.mubr.f32.mxu0 0.0
  %178 = vmatmul.mubr.f32.gmra.mrb[0].mxu0 %v111
  %v179 = vpop.f32.mrb[0].mxu0
  %v180 = vadd.f32 %v108, %v179
  %v181 = vpop.f32.mrb[0].mxu0
  %182 = vdwg.mxu0
  %v183 = vmax.f32 %v180, 0.0
  %v184 = vld [vmem:[%s1 + $0x60] sm:$0xff]
  %v185 = vld [vmem:[%s1 + $0x68] sm:$0xff]
  %v186 = vld [vmem:[%s1 + $0x70] sm:$0xff]
  %v187 = vld [vmem:[%s1 + $0x78] sm:$0xff]
  %v188 = vld [vmem:[%s1 + $0x90] sm:$0x1]
  %v189 = vlaneseq
  %v190 = vshrl.u32 %v189, 7
  %v191 = vsub.s32 0, %v190
  %v192 = vrot.slane %v188, %v191
  %v194 = vsel %vm21, %v183, 0
  %196 = vmatprep.subr.mxu0 0.0
  %197 = vmatpush1.msra.mxu0 %v184
  %198 = vmatprep.subr.mxu0 0.0
  %199 = vmatpush1.msra.mxu0 %v185
  %200 = vmatprep.subr.mxu0 0.0
  %201 = vmatpush1.msra.mxu0 %v186
  %202 = vmatprep.subr.mxu0 0.0
  %203 = vmatpush1.msra.mxu0 %v187
  %204 = vmatprep.subr.mxu0 0.0
  %205 = vmatpush1.msra.mxu0 0.0
  %206 = vmatprep.subr.mxu0 0.0
  %207 = vmatpush1.msra.mxu0 0.0
  %208 = vmatprep.subr.mxu0 0.0
  %209 = vmatpush1.msra.mxu0 0.0
  %210 = vmatprep.subr.mxu0 0.0
  %211 = vmatpush1.msra.mxu0 0.0
  %212 = vmatprep.subr.mxu0 0.0
  %213 = vmatpush1.msra.mxu0 0.0
  %214 = vmatprep.subr.mxu0 0.0
  %215 = vmatpush1.msra.mxu0 0.0
  %216 = vmatprep.subr.mxu0 0.0
  %217 = vmatpush1.msra.mxu0 0.0
  %218 = vmatprep.subr.mxu0 0.0
  %219 = vmatpush1.msra.mxu0 0.0
  %220 = vmatprep.subr.mxu0 0.0
  %221 = vmatpush1.msra.mxu0 0.0
  %222 = vmatprep.subr.mxu0 0.0
  %223 = vmatpush1.msra.mxu0 0.0
  %224 = vmatprep.subr.mxu0 0.0
  %225 = vmatpush1.msra.mxu0 0.0
  %226 = vmatprep.subr.mxu0 0.0
  %227 = vmatpush1.msra.mxu0 0.0
  %228 = vmatprep.subr.mxu0 0.0
  %229 = vmatpush1.msra.mxu0 0.0
  %230 = vmatprep.subr.mxu0 0.0
  %231 = vmatpush1.msra.mxu0 0.0
  %232 = vmatprep.subr.mxu0 0.0
  %233 = vmatpush1.msra.mxu0 0.0
  %234 = vmatprep.subr.mxu0 0.0
  %235 = vmatpush1.msra.mxu0 0.0
  %236 = vmatprep.subr.mxu0 0.0
  %237 = vmatpush1.msra.mxu0 0.0
  %238 = vmatprep.subr.mxu0 0.0
  %239 = vmatpush1.msra.mxu0 0.0
  %240 = vmatprep.subr.mxu0 0.0
  %241 = vmatpush1.msra.mxu0 0.0
  %242 = vmatprep.subr.mxu0 0.0
  %243 = vmatpush1.msra.mxu0 0.0
  %244 = vmatprep.subr.mxu0 0.0
  %245 = vmatpush1.msra.mxu0 0.0
  %246 = vmatprep.subr.mxu0 0.0
  %247 = vmatpush1.msra.mxu0 0.0
  %248 = vmatprep.subr.mxu0 0.0
  %249 = vmatpush1.msra.mxu0 0.0
  %250 = vmatprep.subr.mxu0 0.0
  %251 = vmatpush1.msra.mxu0 0.0
  %252 = vmatprep.subr.mxu0 0.0
  %253 = vmatpush1.msra.mxu0 0.0
  %254 = vmatprep.subr.mxu0 0.0
  %255 = vmatpush1.msra.mxu0 0.0
  %256 = vmatprep.subr.mxu0 0.0
  %257 = vmatpush1.msra.mxu0 0.0
  %258 = vmatprep.subr.mxu0 0.0
  %259 = vmatpush1.msra.mxu0 0.0
  %260 = vmatprep.mubr.f32.mxu0 0.0
  %261 = vmatmul.mubr.f32.gmra.mrb[0].mxu0 %v194
  %v262 = vpop.f32.mrb[0].mxu0
  %v263 = vadd.f32 %v192, %v262
  %v264 = vpop.f32.mrb[0].mxu0
  %265 = vdwg.mxu0
  %v266 = vtanh.pop %v263
  %v267 = vadd.f32 %v266, 1.0
  %v268 = vmul.f32 %v267, 3.5
  %v269 = vadd.f32 %v268, -5.0
  %v270 = vmul.f32 %v269, 1.442695
  %v271 = vpow.pop %v270
  %v272 = vtanh.pop %v180
  %274 = vrot.lane.b32.xlu0 %v180, 96
  %v275 = vpop.permute.xlu0 %274
  %278 = vrot.lane.b32.xlu0 %v271, 4
  %v279 = vpop.permute.xlu0 %278
  %282 = vrot.lane.b32.xlu0 %v272, 104
  %v283 = vpop.permute.xlu0 %282
  %vm285 = vcmask 31744
  %v286 = vsel %vm285, %v275, %v279
  %vm287 = vcmask 64512
  %v288 = vsel %vm287, %v286, %v283
  %vm289 = vcmask 97280
  %290 = vst.msk [vmem:[%s2] sm:$0xff] %vm289, %v288
  // Predicated region
  $region10: #{stochastic_actor_forward.1} parent=0 // pred_check
    _
  $region11: #{stochastic_actor_forward.1} parent=0 // pred_check_branch
    %292 = sbr.rel (0) target = $region13
  $region12: #{stochastic_actor_forward.1} parent=0 // pred_region
    _
  $region13: #{stochastic_actor_forward.1} parent=0 // pred_fallthru
    _
  // Predicated region
  $region14: #{stochastic_actor_forward.1} parent=0 // pred_check
    _
  $region15: #{stochastic_actor_forward.1} parent=0 // pred_check_branch
    %294 = sbr.rel (0) target = $region17
  $region16: #{stochastic_actor_forward.1} parent=0 // pred_region
    _
  $region17: #{stochastic_actor_forward.1} parent=0 // pred_fallthru
    _

</llo_original>
